<compile_context>
chip_gen: v6e
topology: v6e:2x2x1
jax: 0.10.0
libtpu: 0.0.40
codegen_flags: <defaults>
</compile_context>

<pallas_src>
import jax
import jax.numpy as jnp
from jax import lax
from jax.experimental import pallas as pl
from jax.experimental.pallas import tpu as pltpu

_MASK_FILL = -10000000000.0   # torch masked-fill value (plain Python float -> inlined literal)
_SUBLANE = 8
_MAX_TB = 512                 # max row tile (amortizes ~0.35us/step overhead)


def _round_up(x, m):
    return ((x + m - 1) // m) * m


def _linear(x, w_t, b):
    # (TB, Din) . (Din, Dout) on the MXU with f32 accumulate.  The weight is
    # already transposed in HBM so Mosaic does not re-emit an XLU transpose on
    # every grid step.
    return lax.dot_general(
        x, w_t,
        dimension_numbers=(((1,), (0,)), ((), ())),
        preferred_element_type=jnp.float32) + b


def _softmax_store(logits, logits_ref, probs_ref):
    logits_ref[...] = logits
    m = jnp.max(logits, axis=-1, keepdims=True)
    e = jnp.exp(logits - m)
    s = jnp.sum(e, axis=-1, keepdims=True)
    # exact reciprocal keeps probs tight against the f32 reference; flip to
    # approx=True (EUP slot, ~free) if ~1e-3 tolerance is acceptable downstream.
    probs_ref[...] = e * pl.reciprocal(s, approx=False)


def _categorical_kernel_masked(x_ref, wt_ref, b_ref, avail_ref, logits_ref, probs_ref):
    logits = _linear(x_ref[...], wt_ref[...], b_ref[...])
    logits = jnp.where(avail_ref[...] == 0.0, _MASK_FILL, logits)
    _softmax_store(logits, logits_ref, probs_ref)


def _categorical_kernel_nomask(x_ref, wt_ref, b_ref, logits_ref, probs_ref):
    logits = _linear(x_ref[...], wt_ref[...], b_ref[...])
    _softmax_store(logits, logits_ref, probs_ref)


def _vmem_capacity_bytes():
    try:
        return int(pltpu.get_tpu_info().vmem_capacity_bytes)
    except Exception:
        return 64 * (1 << 20)   # conservative: v7x has 64 MiB per TensorCore


def categorical_forward(x, weight_t, bias, available_actions=None):
    """x: (B, Din) f32; weight_t: (Din, Dout) f32 (pre-transposed); bias: (Dout,).
    available_actions: optional (B, Dout), nonzero = available.
    Returns (masked_logits, probs), both (B, Dout) f32."""
    B, Din = x.shape
    Dout = weight_t.shape[1]
    masked = available_actions is not None

    x = x.astype(jnp.float32)
    w_t = weight_t.astype(jnp.float32)
    b = bias.astype(jnp.float32).reshape(1, Dout)

    # Row tile: multiple of 8, at most 512, and small enough that the batch
    # grid has >= 8 steps when B is large (lets the "parallel" axis split
    # across both v7x TensorCores).
    TB = min(_MAX_TB, max(_SUBLANE, _round_up(pl.cdiv(B, 8), _SUBLANE)))

    # VMEM accounting: weight/bias are grid-invariant but still double-buffered
    # by the pipeline, so charge 2x; x/mask/outputs are streamed tiles.
    resident_bytes = 2 * 4 * (Din * Dout + Dout)

    def _tile_bytes(tb):
        t = 2 * 4 * tb * Din            # x, double-buffered
        t += 2 * 2 * 4 * tb * Dout      # logits + probs outputs, double-buffered
        if masked:
            t += 2 * 4 * tb * Dout      # f32 mask, double-buffered
        return t

    vmem_cap = _vmem_capacity_bytes()
    # ~45% of per-core VMEM, never more than 40 MiB.
    budget = min(40 * (1 << 20), (vmem_cap * 45) // 100) - resident_bytes
    while TB > _SUBLANE and _tile_bytes(TB) > budget:
        TB = max(_SUBLANE, ((TB // 2) // _SUBLANE) * _SUBLANE)
    # TODO(synk): for very large heads (4*Din*Dout approaching the VMEM budget)
    # the full weight should stop being resident; that needs a Dout grid axis
    # with a blocked weight spec and a two-pass / online softmax.

    grid = (pl.cdiv(B, TB),)            # ragged last block clipped by Pallas

    x_spec = pl.BlockSpec((TB, Din), lambda i: (i, 0))
    w_spec = pl.BlockSpec((Din, Dout), lambda i: (0, 0))     # resident across steps
    b_spec = pl.BlockSpec((1, Dout), lambda i: (0, 0))       # resident across steps
    out_spec = pl.BlockSpec((TB, Dout), lambda i: (i, 0))    # full-Dout last dim

    if masked:
        avail = available_actions.astype(jnp.float32)
        kernel = _categorical_kernel_masked
        in_specs = [x_spec, w_spec, b_spec,
                    pl.BlockSpec((TB, Dout), lambda i: (i, 0))]
        args = (x, w_t, b, avail)
    else:
        kernel = _categorical_kernel_nomask
        in_specs = [x_spec, w_spec, b_spec]
        args = (x, w_t, b)

    vmem_limit = int(min(max(vmem_cap - (8 << 20), 16 << 20),
                         max(16 << 20,
                             resident_bytes + _tile_bytes(TB) + (4 << 20))))

    in_bytes = 4 * (B * Din + Din * Dout + Dout) + (4 * B * Dout if masked else 0)
    out_bytes = 2 * 4 * B * Dout
    cost = pl.CostEstimate(flops=2 * B * Din * Dout,
                           transcendentals=B * Dout,
                           bytes_accessed=in_bytes + out_bytes)

    logits, probs = pl.pallas_call(
        kernel,
        out_shape=(jax.ShapeDtypeStruct((B, Dout), jnp.float32),
                   jax.ShapeDtypeStruct((B, Dout), jnp.float32)),
        grid=grid,
        in_specs=in_specs,
        out_specs=(out_spec, out_spec),
        compiler_params=pltpu.CompilerParams(
            dimension_semantics=("parallel",),
            vmem_limit_bytes=vmem_limit),
        cost_estimate=cost,
    )(*args)

    return logits, probs


class ProbabilityCategorical:
    """JAX mirror of the modified torch Categorical (holds precomputed probs)."""

    def __init__(self, logits, probs):
        self.logits = logits
        self.probs = probs

    def sample(self):
        return self.probs

    def mode(self):
        return self.probs

    def log_probs(self, actions=None):
        return jnp.log(self.probs)


class Categorical:
    """Linear layer (orthogonal init, gain=0.01, zero bias) + ProbabilityCategorical."""

    def __init__(self, num_inputs, num_outputs, gain=0.01, key=None):
        if key is None:
            key = jax.random.PRNGKey(0)
        ortho = jax.nn.initializers.orthogonal(scale=gain)
        self.weight = ortho(key, (num_outputs, num_inputs), jnp.float32)  # torch layout
        self.weight_t = jnp.asarray(self.weight.T)                        # (Din, Dout), once
        self.bias = jnp.zeros((num_outputs,), jnp.float32)

    def __call__(self, x, available_actions=None):
        logits, probs = categorical_forward(x, self.weight_t, self.bias,
                                            available_actions)
        return ProbabilityCategorical(logits, probs)


if __name__ == "__main__":
    key = jax.random.PRNGKey(0)
    k_x, k_w, k_a, k_x2, k_a2 = jax.random.split(key, 5)

    B, Din, Dout = 8, 32, 16
    x = jax.random.normal(k_x, (B, Din), dtype=jnp.float32)
    # 1 = available, 0 = unavailable
    available_actions = (jax.random.uniform(k_a, (B, Dout)) > 0.2).astype(jnp.float32)

    head = Categorical(Din, Dout, gain=0.01, key=k_w)

    def ref_forward(xv, avail=None):
        logits = jnp.dot(xv, head.weight.T,
                         precision=jax.lax.Precision.HIGHEST) + head.bias
        if avail is not None:
            logits = jnp.where(avail == 0.0, -10000000000.0, logits)
        return logits, jax.nn.softmax(logits, axis=-1)

    # --- masked path ---
    dist = head(x, available_actions)
    jax.block_until_ready(dist.probs)
    ref_logits, ref_probs = ref_forward(x, available_actions)
    assert dist.logits.shape == (B, Dout) and dist.probs.shape == (B, Dout)
    assert jnp.allclose(dist.logits, ref_logits, atol=1e-3, rtol=1e-3)
    assert jnp.allclose(dist.probs, ref_probs, atol=1e-4, rtol=1e-3)
    assert jnp.allclose(dist.sample(), dist.probs)
    assert jnp.allclose(dist.mode(), dist.probs)
    assert jnp.allclose(dist.log_probs(None), jnp.log(dist.probs))

    # --- unmasked path (separate kernel variant: no mask DMA, no where) ---
    dist_nm = head(x)
    jax.block_until_ready(dist_nm.probs)
    ref_logits_nm, ref_probs_nm = ref_forward(x)
    assert jnp.allclose(dist_nm.logits, ref_logits_nm, atol=1e-3, rtol=1e-3)
    assert jnp.allclose(dist_nm.probs, ref_probs_nm, atol=1e-4, rtol=1e-3)

    # --- ragged batch (B not a multiple of the row tile): exercises the
    #     clipped last block instead of wrapper-side padding ---
    B2 = 11
    x2 = jax.random.normal(k_x2, (B2, Din), dtype=jnp.float32)
    avail2 = (jax.random.uniform(k_a2, (B2, Dout)) > 0.3).astype(jnp.float32)
    dist2 = head(x2, avail2)
    jax.block_until_ready(dist2.probs)
    ref_logits2, ref_probs2 = ref_forward(x2, avail2)
    assert dist2.probs.shape == (B2, Dout)
    assert jnp.allclose(dist2.logits, ref_logits2, atol=1e-3, rtol=1e-3)
    assert jnp.allclose(dist2.probs, ref_probs2, atol=1e-4, rtol=1e-3)

    print("KERNEL_OK")
</pallas_src>

<mosaic_0001>
module attributes {stable_mosaic.version = 11 : i64} {
  func.func @_categorical_kernel_masked(%arg0: i32, %arg1: memref<8x32xf32, #tpu.memory_space<vmem>>, %arg2: memref<32x16xf32, #tpu.memory_space<vmem>>, %arg3: memref<1x16xf32, #tpu.memory_space<vmem>>, %arg4: memref<8x16xf32, #tpu.memory_space<vmem>>, %arg5: memref<8x16xf32, #tpu.memory_space<vmem>>, %arg6: memref<8x16xf32, #tpu.memory_space<vmem>>) attributes {dimension_semantics = [#tpu.dimension_semantics<parallel>], iteration_bounds = array<i64: 1>, scalar_prefetch = 0 : i64, scratch_operands = 0 : i64, tpu.core_type = #tpu.core_type<tc>, window_params = [{transform_indices = @transform_0, window_bounds = array<i64: 8, 32>}, {pipeline_mode = #tpu.pipeline_mode<synchronous>, transform_indices = @transform_1, window_bounds = array<i64: 32, 16>}, {pipeline_mode = #tpu.pipeline_mode<synchronous>, transform_indices = @transform_2, window_bounds = array<i64: 1, 16>}, {transform_indices = @transform_3, window_bounds = array<i64: 8, 16>}, {transform_indices = @transform_4, window_bounds = array<i64: 8, 16>}, {transform_indices = @transform_5, window_bounds = array<i64: 8, 16>}]} {
    %c0 = arith.constant 0 : index
    %c0_0 = arith.constant 0 : index
    %0 = vector.load %arg1[%c0, %c0_0] : memref<8x32xf32, #tpu.memory_space<vmem>>, vector<8x32xf32>
    %c0_1 = arith.constant 0 : index
    %c0_2 = arith.constant 0 : index
    %1 = vector.load %arg2[%c0_1, %c0_2] : memref<32x16xf32, #tpu.memory_space<vmem>>, vector<32x16xf32>
    %c0_3 = arith.constant 0 : index
    %c0_4 = arith.constant 0 : index
    %2 = vector.load %arg3[%c0_3, %c0_4] : memref<1x16xf32, #tpu.memory_space<vmem>>, vector<1x16xf32>
    %cst = arith.constant dense<0.000000e+00> : vector<8x16xf32>
    %3 = tpu.matmul %0, %1, %cst {dimension_numbers = #tpu.dot_dimension_numbers<[1], [0], [0], [1], [0, 0, 1, 1], [], []>} : vector<8x32xf32>, vector<32x16xf32>, vector<8x16xf32> -> vector<8x16xf32>
    %4 = vector.broadcast %2 : vector<1x16xf32> to vector<8x16xf32>
    %5 = arith.addf %3, %4 : vector<8x16xf32>
    %c0_5 = arith.constant 0 : index
    %c0_6 = arith.constant 0 : index
    %6 = vector.load %arg4[%c0_5, %c0_6] : memref<8x16xf32, #tpu.memory_space<vmem>>, vector<8x16xf32>
    %cst_7 = arith.constant 0.000000e+00 : f32
    %7 = vector.broadcast %cst_7 : f32 to vector<8x16xf32>
    %8 = arith.cmpf oeq, %6, %7 : vector<8x16xf32>
    %cst_8 = arith.constant -1.000000e+10 : f32
    %9 = vector.broadcast %cst_8 : f32 to vector<8x16xf32>
    %10 = arith.select %8, %9, %5 : vector<8x16xi1>, vector<8x16xf32>
    %c0_9 = arith.constant 0 : index
    %c0_10 = arith.constant 0 : index
    %11 = vector.load %arg5[%c0_9, %c0_10] : memref<8x16xf32, #tpu.memory_space<vmem>>, vector<8x16xf32>
    tpu.vector_store %arg5[%c0_9, %c0_10], %10 {strides = array<i32>} : memref<8x16xf32, #tpu.memory_space<vmem>>, vector<8x16xf32>,
    %cst_11 = arith.constant dense<0xFF800000> : vector<8xf32>
    %12 = vector.multi_reduction <maximumf>, %10, %cst_11 [1] : vector<8x16xf32> to vector<8xf32>
    %13 = vector.shape_cast %12 : vector<8xf32> to vector<8x1xf32>
    %14 = vector.broadcast %13 : vector<8x1xf32> to vector<8x16xf32>
    %15 = arith.subf %10, %14 : vector<8x16xf32>
    %16 = math.exp %15 : vector<8x16xf32>
    %cst_12 = arith.constant dense<0.000000e+00> : vector<8xf32>
    %17 = vector.multi_reduction <add>, %16, %cst_12 [1] : vector<8x16xf32> to vector<8xf32>
    %18 = vector.shape_cast %17 : vector<8xf32> to vector<8x1xf32>
    %19 = tpu.reciprocal %18 : vector<8x1xf32> -> vector<8x1xf32>
    %20 = vector.broadcast %19 : vector<8x1xf32> to vector<8x16xf32>
    %21 = arith.mulf %16, %20 : vector<8x16xf32>
    %c0_13 = arith.constant 0 : index
    %c0_14 = arith.constant 0 : index
    %22 = vector.load %arg6[%c0_13, %c0_14] : memref<8x16xf32, #tpu.memory_space<vmem>>, vector<8x16xf32>
    tpu.vector_store %arg6[%c0_13, %c0_14], %21 {strides = array<i32>} : memref<8x16xf32, #tpu.memory_space<vmem>>, vector<8x16xf32>,
    return
  }
  func.func @transform_0(%arg0: i32) -> (i32, i32) {
    %c0_i32 = arith.constant 0 : i32
    %c0_i32_0 = arith.constant 0 : i32
    return %arg0, %c0_i32 : i32, i32
  }
  func.func @transform_1(%arg0: i32) -> (i32, i32) {
    %c0_i32 = arith.constant 0 : i32
    %c0_i32_0 = arith.constant 0 : i32
    %c0_i32_1 = arith.constant 0 : i32
    return %c0_i32, %c0_i32_0 : i32, i32
  }
  func.func @transform_2(%arg0: i32) -> (i32, i32) {
    %c0_i32 = arith.constant 0 : i32
    %c0_i32_0 = arith.constant 0 : i32
    %c0_i32_1 = arith.constant 0 : i32
    return %c0_i32, %c0_i32_0 : i32, i32
  }
  func.func @transform_3(%arg0: i32) -> (i32, i32) {
    %c0_i32 = arith.constant 0 : i32
    %c0_i32_0 = arith.constant 0 : i32
    return %arg0, %c0_i32 : i32, i32
  }
  func.func @transform_4(%arg0: i32) -> (i32, i32) {
    %c0_i32 = arith.constant 0 : i32
    %c0_i32_0 = arith.constant 0 : i32
    return %arg0, %c0_i32 : i32, i32
  }
  func.func @transform_5(%arg0: i32) -> (i32, i32) {
    %c0_i32 = arith.constant 0 : i32
    %c0_i32_0 = arith.constant 0 : i32
    return %arg0, %c0_i32 : i32, i32
  }
}

</mosaic_0001>

<llo_original>
// kernel: tpu_custom_call.1
$region0: #{tpu_custom_call.1}
  #allocation0 [shape = 'u32[]', space=smem, size = 0x4, offset = 0x4, fixed_abs, tag = 'smem constant byte address 0x4 - core index']
  #allocation1 [shape = 'u32[144,128]{1,0:T(1,128)}', space=vmem, size = 0x12000, scoped, tag = 'internal scratch']
  %s0 = inlined_call_operand.vmem [shape: f32[8,32], index: 0, kind: input, shape index: {}]
  %s1 = inlined_call_operand.vmem [shape: f32[32,16], index: 1, kind: input, shape index: {}]
  %s2 = inlined_call_operand.vmem [shape: f32[1,16], index: 2, kind: input, shape index: {}]
  %s3 = inlined_call_operand.vmem [shape: f32[8,16], index: 3, kind: input, shape index: {}]
  %s4 = inlined_call_operand.hbm [shape: f32[8,16], index: 4, kind: output, shape index: {0}]
  %s5 = inlined_call_operand.hbm [shape: f32[8,16], index: 5, kind: output, shape index: {1}]
  %6 = xla_tuple %s4, %s5
  %s7 = sld [smem:[#allocation0]]
  $region34: #{tpu_custom_call.1} parent=0
    _
  %s9 = ssub.s32 1, %s7
  %s10 = scalar_select 0, %s9, %s7
  $region1: #{tpu_custom_call.1} parent=0
    #allocation2 [shape = 'u8[4096]{0}', space=vmem, size = 0x1000, scoped, tag = 'output window, operand 0, single buffered']
    #allocation3 [shape = 's32[1]{0}', space=sflag, size = 0x4, scoped, tag = 'scoped memory for tpu_custom_call.1']
    #allocation4 [shape = 'u8[4096]{0}', space=vmem, size = 0x1000, scoped, tag = 'output window, operand 1, single buffered']
    #allocation5 [shape = 's32[1]{0}', space=sflag, size = 0x4, scoped, tag = 'scoped memory for tpu_custom_call.1']
    %11 = vsyncpa [#allocation3], 0
    %12 = vsyncpa [#allocation5], 0
    // Predicated region
    $region2: #{tpu_custom_call.1} parent=1 // pred_check
      _
    $region3: #{tpu_custom_call.1} parent=1 // pred_check_branch
      %14 = sbr.rel (0) target = $region5
    $region4: #{tpu_custom_call.1} parent=1 // pred_region
      _
    $region5: #{tpu_custom_call.1} parent=1 // pred_fallthru
      _
    // Predicated region
    $region6: #{tpu_custom_call.1} parent=1 // pred_check
      _
    $region7: #{tpu_custom_call.1} parent=1 // pred_check_branch
      %16 = sbr.rel (0) target = $region9
    $region8: #{tpu_custom_call.1} parent=1 // pred_region
      _
    $region9: #{tpu_custom_call.1} parent=1 // pred_fallthru
      _
    // Predicated region
    $region10: #{tpu_custom_call.1} parent=1 // pred_check
      _
    $region11: #{tpu_custom_call.1} parent=1 // pred_check_branch
      %18 = sbr.rel (0) target = $region13
    $region12: #{tpu_custom_call.1} parent=1 // pred_region
      _
    $region13: #{tpu_custom_call.1} parent=1 // pred_fallthru
      _
    // Predicated region
    $region14: #{tpu_custom_call.1} parent=1 // pred_check
      _
    $region15: #{tpu_custom_call.1} parent=1 // pred_check_branch
      %20 = sbr.rel (0) target = $region17
    $region16: #{tpu_custom_call.1} parent=1 // pred_region
      _
    $region17: #{tpu_custom_call.1} parent=1 // pred_fallthru
      _
    %v21 = vld [vmem:[%s0] sm:$0xff]
    %v22 = vld [vmem:[%s1] sm:$0xff]
    %v23 = vld [vmem:[%s1 + $0x8] sm:$0xff]
    %v24 = vld [vmem:[%s1 + $0x10] sm:$0xff]
    %v25 = vld [vmem:[%s1 + $0x18] sm:$0xff]
    %v26 = vld [vmem:[%s2] sm:$0x1]
    %v28 = vlaneseq
    %v29 = vshrl.u32 %v28, 7
    %v30 = vsub.s32 0, %v29
    %v31 = vrot.slane %v26, %v30
    %vm33 = vcmask 261120
    %v35 = vsel %vm33, %v21, 0
    %37 = vmatprep.subr.mxu0 0.0
    %38 = vmatpush1.msra.mxu0 0.0
    %39 = vmatprep.subr.mxu0 0.0
    %40 = vmatpush1.msra.mxu0 0.0
    %41 = vmatprep.subr.mxu0 0.0
    %42 = vmatpush1.msra.mxu0 0.0
    %43 = vmatprep.subr.mxu0 0.0
    %44 = vmatpush1.msra.mxu0 0.0
    %45 = vmatprep.subr.mxu0 0.0
    %46 = vmatpush1.msra.mxu0 0.0
    %47 = vmatprep.subr.mxu0 0.0
    %48 = vmatpush1.msra.mxu0 0.0
    %49 = vmatprep.subr.mxu0 0.0
    %50 = vmatpush1.msra.mxu0 0.0
    %51 = vmatprep.subr.mxu0 0.0
    %52 = vmatpush1.msra.mxu0 0.0
    %53 = vmatprep.subr.mxu0 0.0
    %54 = vmatpush1.msra.mxu0 0.0
    %55 = vmatprep.subr.mxu0 0.0
    %56 = vmatpush1.msra.mxu0 0.0
    %57 = vmatprep.subr.mxu0 0.0
    %58 = vmatpush1.msra.mxu0 0.0
    %59 = vmatprep.subr.mxu0 0.0
    %60 = vmatpush1.msra.mxu0 0.0
    %61 = vmatprep.subr.mxu0 0.0
    %62 = vmatpush1.msra.mxu0 %v25
    %63 = vmatprep.subr.mxu0 0.0
    %64 = vmatpush1.msra.mxu0 %v24
    %65 = vmatprep.subr.mxu0 0.0
    %66 = vmatpush1.msra.mxu0 %v23
    %67 = vmatprep.subr.mxu0 0.0
    %68 = vmatpush1.msra.mxu0 %v22
    %69 = vmatprep.subr.mxu0 0.0
    %70 = vmatpush2.msra.mxu0 0.0
    %71 = vmatprep.subr.mxu0 0.0
    %72 = vmatpush2.msra.mxu0 0.0
    %73 = vmatprep.subr.mxu0 0.0
    %74 = vmatpush2.msra.mxu0 0.0
    %75 = vmatprep.subr.mxu0 0.0
    %76 = vmatpush2.msra.mxu0 0.0
    %77 = vmatprep.subr.mxu0 0.0
    %78 = vmatpush2.msra.mxu0 0.0
    %79 = vmatprep.subr.mxu0 0.0
    %80 = vmatpush2.msra.mxu0 0.0
    %81 = vmatprep.subr.mxu0 0.0
    %82 = vmatpush2.msra.mxu0 0.0
    %83 = vmatprep.subr.mxu0 0.0
    %84 = vmatpush2.msra.mxu0 0.0
    %85 = vmatprep.subr.mxu0 0.0
    %86 = vmatpush2.msra.mxu0 0.0
    %87 = vmatprep.subr.mxu0 0.0
    %88 = vmatpush2.msra.mxu0 0.0
    %89 = vmatprep.subr.mxu0 0.0
    %90 = vmatpush2.msra.mxu0 0.0
    %91 = vmatprep.subr.mxu0 0.0
    %92 = vmatpush2.msra.mxu0 0.0
    %93 = vmatprep.subr.mxu0 0.0
    %94 = vmatpush2.msra.mxu0 0.0
    %95 = vmatprep.subr.mxu0 0.0
    %96 = vmatpush2.msra.mxu0 0.0
    %97 = vmatprep.subr.mxu0 0.0
    %98 = vmatpush2.msra.mxu0 0.0
    %99 = vmatprep.subr.mxu0 0.0
    %100 = vmatpush2.msra.mxu0 0.0
    %101 = vmatprep.mubr.f32.mxu0 0.0
    %102 = vmatmul.mubr.f32.gmra.mxu0 %v35
    %v103 = vpop.f32.mrf.mxu0
    %v104 = vadd.f32 %v31, %v103
    %v105 = vpop.f32.mrf.mxu0
    %106 = vdwg.mxu0
    %v107 = vld [vmem:[%s3] sm:$0xff]
    %vm108 = vcmp.eq.f32.partialorder %v107, 0.0
    %v109 = vsel %vm108, -1e+10, %v104
    %vm110 = vcmask 130048
    %111 = vst.msk [vmem:[#allocation2] sm:$0xff] %vm110, %v109
    %v112 = vsel %vm110, %v109, -inf
    %113 = vmax.xlane.f32.xlu0 %v112
    %v114 = vpop.xlane.xlu0 %113
    %v115 = vsub.f32 %v109, %v114
    %v116 = vmul.f32 %v115, 1.442695
    %v117 = vpow.pop %v116
    %v118 = vsel %vm110, %v117, 0.0
    %119 = vadd.xlane.f32.xlu0 %v118
    %v120 = vpop.xlane.xlu0 %119
    %v121 = vrcp.pop %v120
    %v122 = vmul.f32 %v117, %v121
    %123 = vst.msk [vmem:[#allocation4] sm:$0xff] %vm110, %v122
    // Predicated region
    $region18: #{tpu_custom_call.1} parent=1 // pred_check
      _
    $region19: #{tpu_custom_call.1} parent=1 // pred_check_branch
      %125 = sbr.rel (0) target = $region21
    $region20: #{tpu_custom_call.1} parent=1 // pred_region
      %s127 = ssub.s32 128, 128
      %128 = vsyncadd [#allocation3], %s127
      %s130 = sshll.u32 [#allocation2], 4
      %s131 = int_to_ptr.vmem [resolvable:$true] %s130
      %133 = dma.vmem_to_hbm [thread:$0]  %s131, 128, %s4, [#allocation3]
    $region21: #{tpu_custom_call.1} parent=1 // pred_fallthru
      _
    // Predicated region
    $region22: #{tpu_custom_call.1} parent=1 // pred_check
      _
    $region23: #{tpu_custom_call.1} parent=1 // pred_check_branch
      %135 = sbr.rel (0) target = $region25
    $region24: #{tpu_custom_call.1} parent=1 // pred_region
      %s137 = ssub.s32 128, 128
      %138 = vsyncadd [#allocation5], %s137
      %s140 = sshll.u32 [#allocation4], 4
      %s141 = int_to_ptr.vmem [resolvable:$true] %s140
      %143 = dma.vmem_to_hbm [thread:$0]  %s141, 128, %s5, [#allocation5]
    $region25: #{tpu_custom_call.1} parent=1 // pred_fallthru
      _
    // Predicated region
    $region26: #{tpu_custom_call.1} parent=1 // pred_check
      _
    $region27: #{tpu_custom_call.1} parent=1 // pred_check_branch
      %145 = sbr.rel (0) target = $region29
    $region28: #{tpu_custom_call.1} parent=1 // pred_region
      %146 = dma.done [#allocation3], 128
    $region29: #{tpu_custom_call.1} parent=1 // pred_fallthru
      _
    // Predicated region
    $region30: #{tpu_custom_call.1} parent=1 // pred_check
      _
    $region31: #{tpu_custom_call.1} parent=1 // pred_check_branch
      %148 = sbr.rel (0) target = $region33
    $region32: #{tpu_custom_call.1} parent=1 // pred_region
      %149 = dma.done [#allocation5], 128
    $region33: #{tpu_custom_call.1} parent=1 // pred_fallthru
      _
    %150 = vsyncpa [#allocation3], 1
    %151 = vsyncpa [#allocation5], 1

</llo_original>
